<compile_context>
chip_gen: v7x
topology: tpu7x:2x2x1
jax: 0.10.0
libtpu: 0.0.40
codegen_flags: <defaults>
</compile_context>

<pallas_src>
import functools

import jax
import jax.numpy as jnp
import numpy as np
from jax import lax
from jax.experimental import pallas as pl
from jax.experimental.pallas import tpu as pltpu


def _round_up(x, m):
    return -(-x // m) * m


_SLAB_WIDTH = 32


def _pack_slab(entries):
    """Pack many tiny 2-D f32 operands into one slab -> a single DMA.

    entries: list of (name, 2-D array).  Each entry starts at an 8-aligned
    sublane offset.  Returns (slab, layout) with layout[name] = (r0, rows, cols).
    """
    layout = {}
    r = 0
    for name, a in entries:
        rows, cols = a.shape
        assert cols <= _SLAB_WIDTH, name
        layout[name] = (r, rows, cols)
        r += _round_up(rows, 8)
    slab = jnp.zeros((_round_up(max(r, 8), 8), _SLAB_WIDTH), jnp.float32)
    for name, a in entries:
        r0, rows, cols = layout[name]
        slab = slab.at[r0:r0 + rows, :cols].set(a.astype(jnp.float32))
    return slab, layout


# ----------------------------------------------------------------------------
# Kernel A (gridless, tiny, runs once): SubNet -> (n, l) pairs, PCT kernel
# table generation, feat_branch pointwise linear and PowNet, all fused.
# ----------------------------------------------------------------------------
def _precompute_kernel(slab_ref, ker_ref, nl_ref, up_ref, pow_ref, *,
                       layout, n_pairs, realmag):
    sl = slab_ref[...]

    def get(name):
        r0, rows, cols = layout[name]
        return sl[r0:r0 + rows, 0:cols]

    # --- SubNet in column orientation: every matmul is a plain (M,K)@(K,1) --
    hT = jnp.maximum(
        jnp.dot(get("sw1T"), get("xT"), preferred_element_type=jnp.float32)
        + get("sb1T"), 0.0)
    nlT = jax.nn.sigmoid(
        jnp.dot(get("sw2T"), hT, preferred_element_type=jnp.float32)
        + get("sb2T")) * 3.0 + 1.0                 # (2K, 1): n's then l's
    nl_ref[...] = nlT
    n_col = nlT[0:n_pairs, :]                      # (K, 1) contiguous slices
    l_col = nlT[n_pairs:, :]                       # (K, 1) (no selector matmuls)

    # --- all K PCT kernels on the flattened (1, ks*ks) grid ------------------
    geom = get("geom")                             # rows: pi*R2, Theta, mask
    pi_r2 = geom[0:1, :]
    theta = geom[1:2, :]
    maskr = geom[2:3, :]
    amp = maskr * jnp.cos(n_col * pi_r2)           # (K, P)
    if realmag == 1:
        # |amplitude * mask * exp(-i l Theta)| == |amplitude| * mask
        ker = jnp.abs(amp) * maskr
    else:
        # Re(amplitude * mask * exp(-i l Theta)) == amplitude*mask*cos(l Theta)
        ker = amp * maskr * jnp.cos(l_col * theta)
    ker_ref[...] = ker

    # --- feat_branch pointwise linear + PowNet (row orientation) -------------
    up = (jnp.dot(get("pooled"), get("fw"),
                  preferred_element_type=jnp.float32) + get("fb"))
    up_ref[...] = up
    hp = jnp.maximum(
        jnp.dot(up, get("pw1"), preferred_element_type=jnp.float32)
        + get("pb1"), 0.0)
    pow_ref[...] = jax.nn.sigmoid(
        jnp.dot(hp, get("pw2"), preferred_element_type=jnp.float32)
        + get("pb2")) * 2.0 + 1.0


# ----------------------------------------------------------------------------
# Kernel B (grid over planes): grouped 'same' conv for all K kernels.
#   plane_ref : (1, Lin)  bf16, zero-padded plane flattened at width Wp
#   ker_ref   : (K, P)    f32 kernel table (tiny)
#   out_ref   : (K, L)    f32, this plane's lane-dense output tile
#   patches   : (P, L)    f32 VMEM scratch, assembled from static shifted loads
# ----------------------------------------------------------------------------
def _pct_conv_kernel(plane_ref, ker_ref, out_ref, patches_ref, *, taps, L):
    row = plane_ref[...].astype(jnp.float32)                   # (1, Lin)
    for p, off in enumerate(taps):                              # static offsets
        patches_ref[p:p + 1, :] = row[:, off:off + L]
    out_ref[...] = jnp.dot(ker_ref[...], patches_ref[...],
                           preferred_element_type=jnp.float32)


def pct_forward(images_nchw, input_kernel, sw1, sb1, sw2, sb2,
                pooled, fw, fb, pw1, pb1, pw2, pb2, ks, realmag):
    """Fused PCT hot path.

    Returns (response_cat (K*N, C, H, W), nl_pairs (K, 2), up (B, 16),
             power (B, 10), (R2, Theta, mask))."""
    assert ks % 2 == 1, "PCT 'same' conv path requires an odd kernelsize"
    N, C, H, W = images_nchw.shape
    NC = N * C
    K2 = sw2.shape[1]           # numberkernel (== 2 * number of (n, l) pairs)
    K = K2 // 2
    P = ks * ks
    pad = ks // 2
    B = pooled.shape[0]

    # --- geometry (constants of kernelsize), plain JAX once -----------------
    xs = jnp.linspace(1.0, float(ks), ks)
    X, Y = jnp.meshgrid(xs, xs, indexing="ij")   # torch.meshgrid default 'ij'
    c = (1.0 + ks) / 2.0
    Xn = (X - c) / (c - 1.0)
    Yn = (Y - c) / (c - 1.0)
    R2 = Xn ** 2 + Yn ** 2
    Theta = jnp.arctan2(Yn, Xn)
    mask = (jnp.sqrt(R2) <= 1.0).astype(jnp.float32)
    geom = jnp.stack([jnp.pi * R2.reshape(-1), Theta.reshape(-1),
                      mask.reshape(-1)], axis=0)                   # (3, P)

    # --- permute fc2 so SubNet emits [n_0..n_{K-1}, l_0..l_{K-1}] ------------
    perm = np.concatenate([np.arange(0, K2, 2), np.arange(1, K2, 2)])
    sw2T_perm = sw2.T[perm, :]
    sb2T_perm = sb2.reshape(-1, 1)[perm, :]

    entries = [
        ("sw1T", sw1.T), ("xT", input_kernel.reshape(-1, 1)),
        ("sb1T", sb1.reshape(-1, 1)),
        ("sw2T", sw2T_perm), ("sb2T", sb2T_perm),
        ("geom", geom),
        ("pooled", pooled), ("fw", fw), ("fb", fb),
        ("pw1", pw1), ("pb1", pb1), ("pw2", pw2), ("pb2", pb2),
    ]
    slab, layout = _pack_slab(entries)

    # --- precompute launch: SubNet + kernel table + feat/PowNet --------------
    ker_f32, nlT, up, power = pl.pallas_call(
        functools.partial(_precompute_kernel, layout=layout, n_pairs=K,
                          realmag=realmag),
        out_shape=(jax.ShapeDtypeStruct((K, P), jnp.float32),
                   jax.ShapeDtypeStruct((K2, 1), jnp.float32),
                   jax.ShapeDtypeStruct((B, fw.shape[1]), jnp.float32),
                   jax.ShapeDtypeStruct((B, pw2.shape[1]), jnp.float32)),
    )(slab)

    # --- layout plumbing: zero-pad + flatten each plane ONCE (no im2col) -----
    Wp = W + ks - 1
    Hp = H + ks - 1
    L = _round_up(H * Wp, 128)                      # lane-dense per-plane tile
    Lin = _round_up(L + (ks - 1) * Wp + (ks - 1), 128)
    planes = images_nchw.reshape(NC, H, W).astype(jnp.float32)
    padded = jnp.pad(planes, ((0, 0), (pad, ks - 1 - pad), (pad, ks - 1 - pad)))
    flat = padded.reshape(NC, Hp * Wp)
    flat = jnp.pad(flat, ((0, 0), (0, Lin - Hp * Wp)))
    flat = flat.astype(jnp.bfloat16).reshape(NC, 1, Lin)   # bf16 input stream

    # Output flat index j (row-major at width Wp) reads input flat index
    # j + dy*Wp + dx -> constant shift per tap -> static shifted loads.
    taps = tuple(dy * Wp + dx for dy in range(ks) for dx in range(ks))

    step_bytes = 2 * (Lin * 2 + K * P * 4 + K * L * 4) + P * L * 4
    vmem_limit = int(min(64 * 2 ** 20, max(32 * 2 ** 20, 4 * step_bytes)))

    resp = pl.pallas_call(
        functools.partial(_pct_conv_kernel, taps=taps, L=L),
        out_shape=jax.ShapeDtypeStruct((K, NC * L), jnp.float32),
        grid=(NC,),
        in_specs=[pl.BlockSpec((None, 1, Lin), lambda p: (p, 0, 0)),
                  pl.BlockSpec((K, P), lambda p: (0, 0))],
        out_specs=pl.BlockSpec((K, L), lambda p: (0, p)),
        scratch_shapes=[pltpu.VMEM((P, L), jnp.float32)],
        compiler_params=pltpu.CompilerParams(
            dimension_semantics=("parallel",),
            vmem_limit_bytes=vmem_limit),
    )(flat, ker_f32)

    # Free reshapes / slices back to the torch.cat([...]) layout (K*N,C,H,W).
    resp = resp.reshape(K, NC, L)[:, :, :H * Wp]
    resp = resp.reshape(K, NC, H, Wp)[:, :, :, :W]
    response_cat = resp.reshape(K, N, C, H, W).reshape(K * N, C, H, W)

    nl_pairs = jnp.stack([nlT[:K, 0], nlT[K:, 0]], axis=1)          # (K, 2)
    return response_cat, nl_pairs, up, power, (R2, Theta, mask)


# ----------------------------------------------------------------------------
# Pure-JAX reference for the PCT grouped conv (sanity check only).
# ----------------------------------------------------------------------------
def _reference_pct(images_nchw, nl_pairs, R2, Theta, mask, realmag,
                   round_bf16=False):
    N, C, H, W = images_nchw.shape
    planes = images_nchw.reshape(N * C, 1, H, W).astype(jnp.float32)
    if round_bf16:
        planes = planes.astype(jnp.bfloat16).astype(jnp.float32)
    outs = []
    for k in range(nl_pairs.shape[0]):
        n, l = nl_pairs[k, 0], nl_pairs[k, 1]
        amplitude = mask * jnp.cos(jnp.pi * n * R2)
        phase = mask * jnp.exp(-1j * l.astype(jnp.complex64) * Theta)
        cres = amplitude * phase
        ker = jnp.abs(cres) if realmag == 1 else jnp.real(cres)
        ker = ker.astype(jnp.float32)
        conv = lax.conv_general_dilated(planes, ker[None, None],
                                        window_strides=(1, 1), padding="SAME")
        outs.append(conv.reshape(N, C, H, W))
    return jnp.concatenate(outs, axis=0)


if __name__ == "__main__":
    # Config mirroring PCT(kerneltype="learn_8", kernelsize=5, powertype="learn",
    #                      corsstype="a_b", targettype="1_1", scenetype="1_0",
    #                      powerinput=2, realmag=1)
    kernelsize = 5
    numberkernel = 8          # SubNet output dim -> 4 (n, l) pairs
    kernelinputdim = 16       # sc1=1, sc2=0 branch
    powerinput = 16           # powerinput != 1 -> 16
    Cfeat = 4

    key = jax.random.PRNGKey(0)
    keys = jax.random.split(key, 13)

    # Deterministic parameter init (synthetic, not a checkpoint load).
    sw1 = jax.random.normal(keys[0], (kernelinputdim, 16), jnp.float32) * 0.1
    sb1 = jax.random.normal(keys[1], (1, 16), jnp.float32) * 0.1
    sw2 = jax.random.normal(keys[2], (16, numberkernel), jnp.float32) * 0.1
    sb2 = jax.random.normal(keys[3], (1, numberkernel), jnp.float32) * 0.1

    pw1 = jax.random.normal(keys[4], (powerinput, 16), jnp.float32) * 0.1
    pb1 = jax.random.normal(keys[5], (1, 16), jnp.float32) * 0.1
    pw2 = jax.random.normal(keys[6], (16, 10), jnp.float32) * 0.1
    pb2 = jax.random.normal(keys[7], (1, 10), jnp.float32) * 0.1

    fw = jax.random.normal(keys[8], (Cfeat, 16), jnp.float32) * 0.1
    fb = jax.random.normal(keys[9], (1, 16), jnp.float32) * 0.1

    # Inputs (small shapes consistent with the forward pass).
    input_kernel = jax.random.normal(keys[10], (1, kernelinputdim), jnp.float32)
    src_masks = jax.random.normal(keys[11], (2, 3, 16, 16), jnp.float32)        # (N,3,H,W)
    pred_masks = jax.random.normal(keys[12], (2, Cfeat, 2, 8, 8), jnp.float32)  # (B,C,T,Hf,Wf)

    # feat_branch: 1x1x1 conv3d + mean pool == mean pool + pointwise linear
    # (the pointwise linear + PowNet are fused into the precompute kernel).
    pooled = jnp.mean(pred_masks, axis=(2, 3, 4))                   # (B, Cfeat)

    results = {}
    for rm in (1, 0):           # exercise both realmag branches
        results[rm] = pct_forward(
            src_masks, input_kernel, sw1, sb1, sw2, sb2,
            pooled, fw, fb, pw1, pb1, pw2, pb2, kernelsize, rm)
    jax.block_until_ready(results)

    response_cat, nl_pairs, up, power, (R2, Theta, mask) = results[1]

    # TODO(synk): keypoint_func / homography / warpPerspective / warp_branch /
    #             KeyAct loss of PCT.forward depend on cv2 + SuperPoint +
    #             LightGlue and have no Pallas equivalent; not reproduced.

    # --- sanity checks against pure-JAX references ---------------------------
    ref_up = pooled @ fw + fb
    ref_power = (jax.nn.sigmoid(
        jnp.maximum(ref_up @ pw1 + pb1, 0.0) @ pw2 + pb2) * 2.0 + 1.0)
    ref_nl = (jax.nn.sigmoid(
        jnp.maximum(input_kernel @ sw1 + sb1, 0.0) @ sw2 + sb2) * 3.0 + 1.0)
    np.testing.assert_allclose(np.asarray(up), np.asarray(ref_up),
                               rtol=1e-4, atol=1e-4)
    np.testing.assert_allclose(np.asarray(power), np.asarray(ref_power),
                               rtol=1e-4, atol=1e-4)
    np.testing.assert_allclose(np.asarray(nl_pairs.reshape(1, -1)),
                               np.asarray(ref_nl), rtol=1e-4, atol=1e-4)

    # Grouped-conv check for BOTH realmag branches.  The reference uses the
    # same bf16-rounded plane stream the kernel reads (kernel table and
    # accumulation stay f32 on both sides).
    for rm in (1, 0):
        resp_k, nl_k = results[rm][0], results[rm][1]
        ref_cat = _reference_pct(src_masks, nl_k, R2, Theta, mask, rm,
                                 round_bf16=True)
        np.testing.assert_allclose(np.asarray(resp_k), np.asarray(ref_cat),
                                   rtol=5e-3, atol=5e-3)

    print("KERNEL_OK")
</pallas_src>

<mosaic_0001>
module attributes {stable_mosaic.version = 11 : i64} {
  func.func @_precompute_kernel(%arg0: memref<144x32xf32, #tpu.memory_space<vmem>>, %arg1: memref<4x25xf32, #tpu.memory_space<vmem>>, %arg2: memref<8x1xf32, #tpu.memory_space<vmem>>, %arg3: memref<2x16xf32, #tpu.memory_space<vmem>>, %arg4: memref<2x10xf32, #tpu.memory_space<vmem>>) attributes {dimension_semantics = [], scalar_prefetch = 0 : i64, scratch_operands = 0 : i64, tpu.core_type = #tpu.core_type<tc>} {
    %c0 = arith.constant 0 : index
    %c0_0 = arith.constant 0 : index
    %0 = vector.load %arg0[%c0, %c0_0] : memref<144x32xf32, #tpu.memory_space<vmem>>, vector<144x32xf32>
    %1 = vector.extract_strided_slice %0 {offsets = [0, 0], sizes = [16, 16], strides = [1, 1]} : vector<144x32xf32> to vector<16x16xf32>
    %2 = vector.extract_strided_slice %0 {offsets = [16, 0], sizes = [16, 1], strides = [1, 1]} : vector<144x32xf32> to vector<16x1xf32>
    %cst = arith.constant dense<0.000000e+00> : vector<16x1xf32>
    %3 = tpu.matmul %1, %2, %cst {dimension_numbers = #tpu.dot_dimension_numbers<[1], [0], [0], [1], [0, 0, 1, 1], [], []>} : vector<16x16xf32>, vector<16x1xf32>, vector<16x1xf32> -> vector<16x1xf32>
    %4 = vector.extract_strided_slice %0 {offsets = [32, 0], sizes = [16, 1], strides = [1, 1]} : vector<144x32xf32> to vector<16x1xf32>
    %5 = arith.addf %3, %4 : vector<16x1xf32>
    %cst_1 = arith.constant 0.000000e+00 : f32
    %6 = vector.broadcast %cst_1 : f32 to vector<16x1xf32>
    %7 = arith.maximumf %5, %6 : vector<16x1xf32>
    %8 = vector.extract_strided_slice %0 {offsets = [48, 0], sizes = [8, 16], strides = [1, 1]} : vector<144x32xf32> to vector<8x16xf32>
    %cst_2 = arith.constant dense<0.000000e+00> : vector<8x1xf32>
    %9 = tpu.matmul %8, %7, %cst_2 {dimension_numbers = #tpu.dot_dimension_numbers<[1], [0], [0], [1], [0, 0, 1, 1], [], []>} : vector<8x16xf32>, vector<16x1xf32>, vector<8x1xf32> -> vector<8x1xf32>
    %10 = vector.extract_strided_slice %0 {offsets = [56, 0], sizes = [8, 1], strides = [1, 1]} : vector<144x32xf32> to vector<8x1xf32>
    %11 = arith.addf %9, %10 : vector<8x1xf32>
    %12 = arith.negf %11 : vector<8x1xf32>
    %13 = math.exp %12 : vector<8x1xf32>
    %cst_3 = arith.constant 1.000000e+00 : f32
    %14 = vector.broadcast %cst_3 : f32 to vector<8x1xf32>
    %15 = arith.addf %14, %13 : vector<8x1xf32>
    %16 = arith.divf %14, %15 : vector<8x1xf32>
    %cst_4 = arith.constant 3.000000e+00 : f32
    %17 = vector.broadcast %cst_4 : f32 to vector<8x1xf32>
    %18 = arith.mulf %16, %17 : vector<8x1xf32>
    %cst_5 = arith.constant 1.000000e+00 : f32
    %19 = vector.broadcast %cst_5 : f32 to vector<8x1xf32>
    %20 = arith.addf %18, %19 : vector<8x1xf32>
    %c0_6 = arith.constant 0 : index
    %c0_7 = arith.constant 0 : index
    %21 = vector.load %arg2[%c0_6, %c0_7] : memref<8x1xf32, #tpu.memory_space<vmem>>, vector<8x1xf32>
    tpu.vector_store %arg2[%c0_6, %c0_7], %20 {strides = array<i32>} : memref<8x1xf32, #tpu.memory_space<vmem>>, vector<8x1xf32>,
    %22 = vector.extract_strided_slice %20 {offsets = [0, 0], sizes = [4, 1], strides = [1, 1]} : vector<8x1xf32> to vector<4x1xf32>
    %23 = vector.extract_strided_slice %0 {offsets = [64, 0], sizes = [3, 25], strides = [1, 1]} : vector<144x32xf32> to vector<3x25xf32>
    %24 = vector.extract_strided_slice %23 {offsets = [0, 0], sizes = [1, 25], strides = [1, 1]} : vector<3x25xf32> to vector<1x25xf32>
    %25 = vector.extract_strided_slice %23 {offsets = [2, 0], sizes = [1, 25], strides = [1, 1]} : vector<3x25xf32> to vector<1x25xf32>
    %26 = vector.broadcast %22 : vector<4x1xf32> to vector<4x25xf32>
    %27 = vector.broadcast %24 : vector<1x25xf32> to vector<4x25xf32>
    %28 = arith.mulf %26, %27 : vector<4x25xf32>
    %29 = math.cos %28 : vector<4x25xf32>
    %30 = vector.broadcast %25 : vector<1x25xf32> to vector<4x25xf32>
    %31 = arith.mulf %30, %29 : vector<4x25xf32>
    %32 = math.absf %31 : vector<4x25xf32>
    %33 = vector.broadcast %25 : vector<1x25xf32> to vector<4x25xf32>
    %34 = arith.mulf %32, %33 : vector<4x25xf32>
    %c0_8 = arith.constant 0 : index
    %c0_9 = arith.constant 0 : index
    %35 = vector.load %arg1[%c0_8, %c0_9] : memref<4x25xf32, #tpu.memory_space<vmem>>, vector<4x25xf32>
    tpu.vector_store %arg1[%c0_8, %c0_9], %34 {strides = array<i32>} : memref<4x25xf32, #tpu.memory_space<vmem>>, vector<4x25xf32>,
    %36 = vector.extract_strided_slice %0 {offsets = [72, 0], sizes = [2, 4], strides = [1, 1]} : vector<144x32xf32> to vector<2x4xf32>
    %37 = vector.extract_strided_slice %0 {offsets = [80, 0], sizes = [4, 16], strides = [1, 1]} : vector<144x32xf32> to vector<4x16xf32>
    %cst_10 = arith.constant dense<0.000000e+00> : vector<2x16xf32>
    %38 = tpu.matmul %36, %37, %cst_10 {dimension_numbers = #tpu.dot_dimension_numbers<[1], [0], [0], [1], [0, 0, 1, 1], [], []>} : vector<2x4xf32>, vector<4x16xf32>, vector<2x16xf32> -> vector<2x16xf32>
    %39 = vector.extract_strided_slice %0 {offsets = [88, 0], sizes = [1, 16], strides = [1, 1]} : vector<144x32xf32> to vector<1x16xf32>
    %40 = vector.broadcast %39 : vector<1x16xf32> to vector<2x16xf32>
    %41 = arith.addf %38, %40 : vector<2x16xf32>
    %c0_11 = arith.constant 0 : index
    %c0_12 = arith.constant 0 : index
    %42 = vector.load %arg3[%c0_11, %c0_12] : memref<2x16xf32, #tpu.memory_space<vmem>>, vector<2x16xf32>
    tpu.vector_store %arg3[%c0_11, %c0_12], %41 {strides = array<i32>} : memref<2x16xf32, #tpu.memory_space<vmem>>, vector<2x16xf32>,
    %43 = vector.extract_strided_slice %0 {offsets = [96, 0], sizes = [16, 16], strides = [1, 1]} : vector<144x32xf32> to vector<16x16xf32>
    %cst_13 = arith.constant dense<0.000000e+00> : vector<2x16xf32>
    %44 = tpu.matmul %41, %43, %cst_13 {dimension_numbers = #tpu.dot_dimension_numbers<[1], [0], [0], [1], [0, 0, 1, 1], [], []>} : vector<2x16xf32>, vector<16x16xf32>, vector<2x16xf32> -> vector<2x16xf32>
    %45 = vector.extract_strided_slice %0 {offsets = [112, 0], sizes = [1, 16], strides = [1, 1]} : vector<144x32xf32> to vector<1x16xf32>
    %46 = vector.broadcast %45 : vector<1x16xf32> to vector<2x16xf32>
    %47 = arith.addf %44, %46 : vector<2x16xf32>
    %cst_14 = arith.constant 0.000000e+00 : f32
    %48 = vector.broadcast %cst_14 : f32 to vector<2x16xf32>
    %49 = arith.maximumf %47, %48 : vector<2x16xf32>
    %50 = vector.extract_strided_slice %0 {offsets = [120, 0], sizes = [16, 10], strides = [1, 1]} : vector<144x32xf32> to vector<16x10xf32>
    %cst_15 = arith.constant dense<0.000000e+00> : vector<2x10xf32>
    %51 = tpu.matmul %49, %50, %cst_15 {dimension_numbers = #tpu.dot_dimension_numbers<[1], [0], [0], [1], [0, 0, 1, 1], [], []>} : vector<2x16xf32>, vector<16x10xf32>, vector<2x10xf32> -> vector<2x10xf32>
    %52 = vector.extract_strided_slice %0 {offsets = [136, 0], sizes = [1, 10], strides = [1, 1]} : vector<144x32xf32> to vector<1x10xf32>
    %53 = vector.broadcast %52 : vector<1x10xf32> to vector<2x10xf32>
    %54 = arith.addf %51, %53 : vector<2x10xf32>
    %55 = arith.negf %54 : vector<2x10xf32>
    %56 = math.exp %55 : vector<2x10xf32>
    %cst_16 = arith.constant 1.000000e+00 : f32
    %57 = vector.broadcast %cst_16 : f32 to vector<2x10xf32>
    %58 = arith.addf %57, %56 : vector<2x10xf32>
    %59 = arith.divf %57, %58 : vector<2x10xf32>
    %cst_17 = arith.constant 2.000000e+00 : f32
    %60 = vector.broadcast %cst_17 : f32 to vector<2x10xf32>
    %61 = arith.mulf %59, %60 : vector<2x10xf32>
    %cst_18 = arith.constant 1.000000e+00 : f32
    %62 = vector.broadcast %cst_18 : f32 to vector<2x10xf32>
    %63 = arith.addf %61, %62 : vector<2x10xf32>
    %c0_19 = arith.constant 0 : index
    %c0_20 = arith.constant 0 : index
    %64 = vector.load %arg4[%c0_19, %c0_20] : memref<2x10xf32, #tpu.memory_space<vmem>>, vector<2x10xf32>
    tpu.vector_store %arg4[%c0_19, %c0_20], %63 {strides = array<i32>} : memref<2x10xf32, #tpu.memory_space<vmem>>, vector<2x10xf32>,
    return
  }
}

</mosaic_0001>

<llo_original>
// kernel: tpu_custom_call.1
$region0: #{tpu_custom_call.1}
  #allocation0 [shape = 'u32[]', space=smem, size = 0x4, offset = 0x4, fixed_abs, tag = 'smem constant byte address 0x4 - core index']
  #allocation1 [shape = 'u32[144,128]{1,0:T(1,128)}', space=vmem, size = 0x12000, scoped, tag = 'internal scratch']
  %s0 = inlined_call_operand.vmem [shape: f32[144,32], index: 0, kind: input, shape index: {}]
  %s1 = inlined_call_operand.hbm [shape: f32[4,25], index: 1, kind: output, shape index: {0}]
  %s2 = inlined_call_operand.vmem [shape: f32[8,1], index: 2, kind: output, shape index: {1}]
  %s3 = inlined_call_operand.hbm [shape: f32[2,16], index: 3, kind: output, shape index: {2}]
  %s4 = inlined_call_operand.hbm [shape: f32[2,10], index: 4, kind: output, shape index: {3}]
  %5 = xla_tuple %s1, %s2, %s3, %s4
  %s6 = sld [smem:[#allocation0]]
  $region38: #{tpu_custom_call.1} parent=0
    _
  %s8 = ssub.s32 1, %s6
  %s9 = scalar_select 0, %s8, %s6
  $region1: #{tpu_custom_call.1} parent=0
    #allocation2 [shape = 'u8[2048]{0}', space=vmem, size = 0x800, scoped, tag = 'output window, operand 0, single buffered']
    #allocation3 [shape = 's32[1]{0}', space=sflag, size = 0x4, scoped, tag = 'scoped memory for tpu_custom_call.1']
    #allocation4 [shape = 'u8[1024]{0}', space=vmem, size = 0x400, scoped, tag = 'output window, operand 2, single buffered']
    #allocation5 [shape = 's32[1]{0}', space=sflag, size = 0x4, scoped, tag = 'scoped memory for tpu_custom_call.1']
    #allocation6 [shape = 'u8[1024]{0}', space=vmem, size = 0x400, scoped, tag = 'output window, operand 3, single buffered']
    %10 = vsyncpa [#allocation3], 0
    %11 = vsyncpa [#allocation5], 0
    // Predicated region
    $region2: #{tpu_custom_call.1} parent=1 // pred_check
      _
    $region3: #{tpu_custom_call.1} parent=1 // pred_check_branch
      %13 = sbr.rel (0) target = $region5
    $region4: #{tpu_custom_call.1} parent=1 // pred_region
      _
    $region5: #{tpu_custom_call.1} parent=1 // pred_fallthru
      _
    %v14 = vld [vmem:[%s0] sm:$0xff]
    %v15 = vld [vmem:[%s0 + $0x8] sm:$0xff]
    %v16 = vld [vmem:[%s0 + $0x10] sm:$0xff]
    %v17 = vld [vmem:[%s0 + $0x18] sm:$0xff]
    %v18 = vld [vmem:[%s0 + $0x20] sm:$0xff]
    %v19 = vld [vmem:[%s0 + $0x28] sm:$0xff]
    %v20 = vld [vmem:[%s0 + $0x30] sm:$0xff]
    %v21 = vld [vmem:[%s0 + $0x38] sm:$0xff]
    %v22 = vld [vmem:[%s0 + $0x40] sm:$0xff]
    %v23 = vld [vmem:[%s0 + $0x48] sm:$0xff]
    %v24 = vld [vmem:[%s0 + $0x50] sm:$0xff]
    %v25 = vld [vmem:[%s0 + $0x58] sm:$0xff]
    %v26 = vld [vmem:[%s0 + $0x60] sm:$0xff]
    %v27 = vld [vmem:[%s0 + $0x68] sm:$0xff]
    %v28 = vld [vmem:[%s0 + $0x70] sm:$0xff]
    %v29 = vld [vmem:[%s0 + $0x78] sm:$0xff]
    %v30 = vld [vmem:[%s0 + $0x80] sm:$0xff]
    %v31 = vld [vmem:[%s0 + $0x88] sm:$0xff]
    %vm32 = vcmask 130048
    %v34 = vsel %vm32, %v14, 0
    %v37 = vsel %vm32, %v15, 0
    %39 = vmatprep.subr.mxu0 0.0
    %40 = vmatpush1.msra.mxu0 %v16
    %41 = vmatprep.subr.mxu0 0.0
    %42 = vmatpush1.msra.mxu0 %v17
    %43 = vmatprep.subr.mxu0 0.0
    %44 = vmatpush1.msra.mxu0 0.0
    %45 = vmatprep.subr.mxu0 0.0
    %46 = vmatpush1.msra.mxu0 0.0
    %47 = vmatprep.subr.mxu0 0.0
    %48 = vmatpush1.msra.mxu0 0.0
    %49 = vmatprep.subr.mxu0 0.0
    %50 = vmatpush1.msra.mxu0 0.0
    %51 = vmatprep.subr.mxu0 0.0
    %52 = vmatpush1.msra.mxu0 0.0
    %53 = vmatprep.subr.mxu0 0.0
    %54 = vmatpush1.msra.mxu0 0.0
    %55 = vmatprep.subr.mxu0 0.0
    %56 = vmatpush1.msra.mxu0 0.0
    %57 = vmatprep.subr.mxu0 0.0
    %58 = vmatpush1.msra.mxu0 0.0
    %59 = vmatprep.subr.mxu0 0.0
    %60 = vmatpush1.msra.mxu0 0.0
    %61 = vmatprep.subr.mxu0 0.0
    %62 = vmatpush1.msra.mxu0 0.0
    %63 = vmatprep.subr.mxu0 0.0
    %64 = vmatpush1.msra.mxu0 0.0
    %65 = vmatprep.subr.mxu0 0.0
    %66 = vmatpush1.msra.mxu0 0.0
    %67 = vmatprep.subr.mxu0 0.0
    %68 = vmatpush1.msra.mxu0 0.0
    %69 = vmatprep.subr.mxu0 0.0
    %70 = vmatpush1.msra.mxu0 0.0
    %71 = vmatprep.subr.mxu0 0.0
    %72 = vmatpush1.msra.mxu0 0.0
    %73 = vmatprep.subr.mxu0 0.0
    %74 = vmatpush1.msra.mxu0 0.0
    %75 = vmatprep.subr.mxu0 0.0
    %76 = vmatpush1.msra.mxu0 0.0
    %77 = vmatprep.subr.mxu0 0.0
    %78 = vmatpush1.msra.mxu0 0.0
    %79 = vmatprep.subr.mxu0 0.0
    %80 = vmatpush1.msra.mxu0 0.0
    %81 = vmatprep.subr.mxu0 0.0
    %82 = vmatpush1.msra.mxu0 0.0
    %83 = vmatprep.subr.mxu0 0.0
    %84 = vmatpush1.msra.mxu0 0.0
    %85 = vmatprep.subr.mxu0 0.0
    %86 = vmatpush1.msra.mxu0 0.0
    %87 = vmatprep.subr.mxu0 0.0
    %88 = vmatpush1.msra.mxu0 0.0
    %89 = vmatprep.subr.mxu0 0.0
    %90 = vmatpush1.msra.mxu0 0.0
    %91 = vmatprep.subr.mxu0 0.0
    %92 = vmatpush1.msra.mxu0 0.0
    %93 = vmatprep.subr.mxu0 0.0
    %94 = vmatpush1.msra.mxu0 0.0
    %95 = vmatprep.subr.mxu0 0.0
    %96 = vmatpush1.msra.mxu0 0.0
    %97 = vmatprep.subr.mxu0 0.0
    %98 = vmatpush1.msra.mxu0 0.0
    %99 = vmatprep.subr.mxu0 0.0
    %100 = vmatpush1.msra.mxu0 0.0
    %101 = vmatprep.subr.mxu0 0.0
    %102 = vmatpush1.msra.mxu0 0.0
    %103 = vmatprep.mubr.f32.mxu0 0.0
    %104 = vmatmul.mubr.f32.gmra.mrb[0].mxu0 %v34
    %v105 = vpop.f32.mrb[0].mxu0
    %v106 = vadd.f32 %v18, %v105
    %v107 = vpop.f32.mrb[0].mxu0
    %108 = vmatprep.mubr.f32.mxu0 0.0
    %109 = vmatmul.mubr.f32.gmra.mrb[0].mxu0 %v37
    %v110 = vpop.f32.mrb[0].mxu0
    %v111 = vadd.f32 %v19, %v110
    %v112 = vpop.f32.mrb[0].mxu0
    %113 = vdwg.mxu0
    %v114 = vmax.f32 %v106, 0.0
    %v115 = vmax.f32 %v111, 0.0
    %v117 = vsel %vm32, %v20, 0
    %119 = vmatprep.subr.mxu0 0.0
    %120 = vmatpush1.msra.mxu0 %v114
    %121 = vmatprep.subr.mxu0 0.0
    %122 = vmatpush1.msra.mxu0 %v115
    %123 = vmatprep.subr.mxu0 0.0
    %124 = vmatpush1.msra.mxu0 0.0
    %125 = vmatprep.subr.mxu0 0.0
    %126 = vmatpush1.msra.mxu0 0.0
    %127 = vmatprep.subr.mxu0 0.0
    %128 = vmatpush1.msra.mxu0 0.0
    %129 = vmatprep.subr.mxu0 0.0
    %130 = vmatpush1.msra.mxu0 0.0
    %131 = vmatprep.subr.mxu0 0.0
    %132 = vmatpush1.msra.mxu0 0.0
    %133 = vmatprep.subr.mxu0 0.0
    %134 = vmatpush1.msra.mxu0 0.0
    %135 = vmatprep.subr.mxu0 0.0
    %136 = vmatpush1.msra.mxu0 0.0
    %137 = vmatprep.subr.mxu0 0.0
    %138 = vmatpush1.msra.mxu0 0.0
    %139 = vmatprep.subr.mxu0 0.0
    %140 = vmatpush1.msra.mxu0 0.0
    %141 = vmatprep.subr.mxu0 0.0
    %142 = vmatpush1.msra.mxu0 0.0
    %143 = vmatprep.subr.mxu0 0.0
    %144 = vmatpush1.msra.mxu0 0.0
    %145 = vmatprep.subr.mxu0 0.0
    %146 = vmatpush1.msra.mxu0 0.0
    %147 = vmatprep.subr.mxu0 0.0
    %148 = vmatpush1.msra.mxu0 0.0
    %149 = vmatprep.subr.mxu0 0.0
    %150 = vmatpush1.msra.mxu0 0.0
    %151 = vmatprep.subr.mxu0 0.0
    %152 = vmatpush1.msra.mxu0 0.0
    %153 = vmatprep.subr.mxu0 0.0
    %154 = vmatpush1.msra.mxu0 0.0
    %155 = vmatprep.subr.mxu0 0.0
    %156 = vmatpush1.msra.mxu0 0.0
    %157 = vmatprep.subr.mxu0 0.0
    %158 = vmatpush1.msra.mxu0 0.0
    %159 = vmatprep.subr.mxu0 0.0
    %160 = vmatpush1.msra.mxu0 0.0
    %161 = vmatprep.subr.mxu0 0.0
    %162 = vmatpush1.msra.mxu0 0.0
    %163 = vmatprep.subr.mxu0 0.0
    %164 = vmatpush1.msra.mxu0 0.0
    %165 = vmatprep.subr.mxu0 0.0
    %166 = vmatpush1.msra.mxu0 0.0
    %167 = vmatprep.subr.mxu0 0.0
    %168 = vmatpush1.msra.mxu0 0.0
    %169 = vmatprep.subr.mxu0 0.0
    %170 = vmatpush1.msra.mxu0 0.0
    %171 = vmatprep.subr.mxu0 0.0
    %172 = vmatpush1.msra.mxu0 0.0
    %173 = vmatprep.subr.mxu0 0.0
    %174 = vmatpush1.msra.mxu0 0.0
    %175 = vmatprep.subr.mxu0 0.0
    %176 = vmatpush1.msra.mxu0 0.0
    %177 = vmatprep.subr.mxu0 0.0
    %178 = vmatpush1.msra.mxu0 0.0
    %179 = vmatprep.subr.mxu0 0.0
    %180 = vmatpush1.msra.mxu0 0.0
    %181 = vmatprep.subr.mxu0 0.0
    %182 = vmatpush1.msra.mxu0 0.0
    %183 = vmatprep.mubr.f32.mxu0 0.0
    %184 = vmatmul.mubr.f32.gmra.mrb[0].mxu0 %v117
    %v185 = vpop.f32.mrb[0].mxu0
    %v186 = vadd.f32 %v21, %v185
    %v187 = vpop.f32.mrb[0].mxu0
    %188 = vdwg.mxu0
    %v189 = vxor.u32 %v186, 2147483648
    %v190 = vmul.f32 %v189, 1.442695
    %v191 = vpow.pop %v190
    %v192 = vadd.f32 %v191, 1.0
    %v193 = vrcp.pop %v192
    %v194 = vmul.f32 1.0, %v193
    %v195 = vmul.f32 %v194, 3.0
    %v196 = vadd.f32 %v195, 1.0
    %vm197 = vcmask 7168
    %198 = vst.msk [vmem:[%s2] sm:$0xff] %vm197, %v196
    %200 = vset.pattern.permute.xlu0 0
    %201 = vperm.xlu0 %200, %v196
    %v202 = vpop.permute.xlu0 %201
    %v204 = vlaneseq
    %v205 = vshrl.u32 %v204, 7
    %v206 = vsub.s32 0, %v205
    %v207 = vrot.slane %v22, %v206
    %v208 = vmul.f32 %v202, %v207
    %v209 = vand.u32 2147483647, %v208
    %vm210 = vcmp.le.f32.partialorder %v209, 0.7853982
    %vm211 = vcmp.lt.s32.totalorder %v208, 0
    %v212 = vand.u32 %v208, 2139095040
    %v213 = vshrl.u32 %v212, 23
    %v214 = vsub.s32 %v213, 127
    %v215 = vand.u32 2147483647, %v208
    %v216 = vand.u32 %v215, 8388607
    %v217 = vor.u32 %v216, 8388608
    %v218 = vsub.s32 0, %v217
    %v219 = vadd.s32 %v214, 1
    %vm220 = vcmp.gt.s32.totalorder %v219, 0
    %v221 = vsel %vm220, %v219, 0
    %v222 = vshrl.u32 %v221, 5
    %v223 = vand.u32 %v221, 31
    %v224 = vsub.s32 32, %v223
    %v225 = vshrl.u32 683565275, %v224
    %v226 = vshll.u32 683565275, %v223
    %v227 = vshrl.u32 2475754826, %v224
    %v228 = vor.u32 %v226, %v227
    %v229 = vshll.u32 2475754826, %v223
    %v230 = vshrl.u32 2131351028, %v224
    %v231 = vor.u32 %v229, %v230
    %v232 = vshll.u32 2131351028, %v223
    %v233 = vshrl.u32 2102212464, %v224
    %v234 = vor.u32 %v232, %v233
    %v235 = vshll.u32 2102212464, %v223
    %v236 = vshrl.u32 920167782, %v224
    %v237 = vor.u32 %v235, %v236
    %v238 = vshll.u32 920167782, %v223
    %v239 = vshrl.u32 1326507024, %v224
    %v240 = vor.u32 %v238, %v239
    %vm241 = vcmp.lt.s32.totalorder %v222, 1
    %vm242 = vcmp.lt.s32.totalorder %v222, 2
    %vm243 = vcmp.lt.s32.totalorder %v222, 3
    %vm244 = vcmp.lt.s32.totalorder %v222, 4
    %v245 = vsel %vm241, %v225, %v228
    %v246 = vsel %vm244, %v234, 2102212464
    %v247 = vsel %vm243, %v231, %v246
    %v248 = vsel %vm242, %v245, %v247
    %v249 = vsel %vm241, %v228, %v231
    %v250 = vsel %vm244, %v237, 920167782
    %v251 = vsel %vm243, %v234, %v250
    %v252 = vsel %vm242, %v249, %v251
    %v253 = vsel %vm241, %v231, %v234
    %v254 = vsel %vm244, %v240, 1326507024
    %v255 = vsel %vm243, %v237, %v254
    %v256 = vsel %vm242, %v253, %v255
    %v257 = vshll.u32 %v217, 8
    %v258 = vmul.u32.u64.compose %v257, %v256
    %v259 = vextract.low.u32 %v258
    %v260 = vextract.high.u32 %v258
    %v261 = vmul.u32.u64.compose %v257, %v252
    %v262 = vextract.low.u32 %v261
    %v263 = vextract.high.u32 %v261
    %v264 = vmul.u32 %v257, %v248
    %v265 = vadd.s32 %v260, %v262
    %vm266 = vc.u32 %v260, %v262
    %v267 = vadd.s32 %v263, 1
    %v268 = vsel %vm266, %v267, %v263
    %v269 = vadd.s32 %v264, %v268
    %v270 = vadd.s32 %v269, 536870912
    %v271 = vshrl.u32 %v270, 30
    %v272 = vshll.u32 %v271, 30
    %v273 = vsub.s32 %v269, %v272
    %vm274 = vcmp.lt.s32.totalorder %v273, 0
    %v275 = vsub.s32 0, %v273
    %v276 = vsel %vm274, %v275, %v273
    %v277 = vclz %v276
    %v278 = vsub.s32 %v277, 2
    %vm279 = vcmp.gt.s32.totalorder 0, %v278
    %v280 = vsel %vm279, 0, %v278
    %v281 = vsub.s32 32, %v280
    %v282 = vshll.u32 %v273, %v280
    %v283 = vshrl.u32 %v265, %v281
    %v284 = vor.u32 %v282, %v283
    %v285 = vsub.s32 4294967266, %v280
    %v286 = vadd.s32 %v285, 127
    %v287 = vshll.u32 %v286, 23
    %v288 = vor.u32 4788187, %v287
    %v289 = vand.u32 2147483647, %v288
    %v291 = vcvt.s32.f32 %v284
    %v292 = vmul.f32 %v291, %v289
    %v293 = vxor.u32 %v292, 2147483648
    %v294 = vsel %vm211, %v293, %v292
    %v295 = vsub.s32 4, %v271
    %v296 = vsel %vm211, %v295, %v271
    %v297 = vsel %vm210, %v208, %v294
    %v298 = vsel %vm210, 0, %v296
    %v299 = vcosq.f32.pop %v297
    %v300 = vsinq.f32.pop %v297
    %vm301 = vweird.f32 %v208
    %v302 = vand.u32 %v298, 3
    %vm303 = vcmp.lt.s32.totalorder %v302, 2
    %vm304 = vcmp.eq.s32.totalorder %v302, 0
    %v305 = vxor.u32 %v300, 2147483648
    %v306 = vsel %vm304, %v299, %v305
    %vm307 = vcmp.eq.s32.totalorder %v302, 2
    %v308 = vxor.u32 %v299, 2147483648
    %v309 = vsel %vm307, %v308, %v300
    %v310 = vsel %vm303, %v306, %v309
    %v311 = vsel %vm301, nan, %v310
    %v312 = vlaneseq
    %v313 = vshrl.u32 %v312, 7
    %v314 = vsub.s32 2, %v313
    %v315 = vrot.slane %v22, %v314
    %v316 = vmul.f32 %v315, %v311
    %v317 = vand.u32 2147483647, %v316
    %v318 = vmul.f32 %v317, %v315
    %vm319 = vcmask 199680
    %320 = vst.msk [vmem:[#allocation2] sm:$0xf] %vm319, %v318
    %v321 = vlaneseq
    %v322 = vshrl.u32 %v321, 7
    %v323 = vsub.s32 0, %v322
    %v324 = vrot.slane %v25, %v323
    %vm325 = vcmask 31744
    %v327 = vsel %vm325, %v23, 0
    %vm329 = vcmask 1043456
    %v331 = vsel %vm329, %v24, 0
    %333 = vmatprep.subr.mxu0 0.0
    %334 = vmatpush1.msra.mxu0 %v331
    %335 = vmatprep.subr.mxu0 0.0
    %336 = vmatpush1.msra.mxu0 0.0
    %337 = vmatprep.subr.mxu0 0.0
    %338 = vmatpush1.msra.mxu0 0.0
    %339 = vmatprep.subr.mxu0 0.0
    %340 = vmatpush1.msra.mxu0 0.0
    %341 = vmatprep.subr.mxu0 0.0
    %342 = vmatpush1.msra.mxu0 0.0
    %343 = vmatprep.subr.mxu0 0.0
    %344 = vmatpush1.msra.mxu0 0.0
    %345 = vmatprep.subr.mxu0 0.0
    %346 = vmatpush1.msra.mxu0 0.0
    %347 = vmatprep.subr.mxu0 0.0
    %348 = vmatpush1.msra.mxu0 0.0
    %349 = vmatprep.subr.mxu0 0.0
    %350 = vmatpush1.msra.mxu0 0.0
    %351 = vmatprep.subr.mxu0 0.0
    %352 = vmatpush1.msra.mxu0 0.0
    %353 = vmatprep.subr.mxu0 0.0
    %354 = vmatpush1.msra.mxu0 0.0
    %355 = vmatprep.subr.mxu0 0.0
    %356 = vmatpush1.msra.mxu0 0.0
    %357 = vmatprep.subr.mxu0 0.0
    %358 = vmatpush1.msra.mxu0 0.0
    %359 = vmatprep.subr.mxu0 0.0
    %360 = vmatpush1.msra.mxu0 0.0
    %361 = vmatprep.subr.mxu0 0.0
    %362 = vmatpush1.msra.mxu0 0.0
    %363 = vmatprep.subr.mxu0 0.0
    %364 = vmatpush1.msra.mxu0 0.0
    %365 = vmatprep.subr.mxu0 0.0
    %366 = vmatpush1.msra.mxu0 0.0
    %367 = vmatprep.subr.mxu0 0.0
    %368 = vmatpush1.msra.mxu0 0.0
    %369 = vmatprep.subr.mxu0 0.0
    %370 = vmatpush1.msra.mxu0 0.0
    %371 = vmatprep.subr.mxu0 0.0
    %372 = vmatpush1.msra.mxu0 0.0
    %373 = vmatprep.subr.mxu0 0.0
    %374 = vmatpush1.msra.mxu0 0.0
    %375 = vmatprep.subr.mxu0 0.0
    %376 = vmatpush1.msra.mxu0 0.0
    %377 = vmatprep.subr.mxu0 0.0
    %378 = vmatpush1.msra.mxu0 0.0
    %379 = vmatprep.subr.mxu0 0.0
    %380 = vmatpush1.msra.mxu0 0.0
    %381 = vmatprep.subr.mxu0 0.0
    %382 = vmatpush1.msra.mxu0 0.0
    %383 = vmatprep.subr.mxu0 0.0
    %384 = vmatpush1.msra.mxu0 0.0
    %385 = vmatprep.subr.mxu0 0.0
    %386 = vmatpush1.msra.mxu0 0.0
    %387 = vmatprep.subr.mxu0 0.0
    %388 = vmatpush1.msra.mxu0 0.0
    %389 = vmatprep.subr.mxu0 0.0
    %390 = vmatpush1.msra.mxu0 0.0
    %391 = vmatprep.subr.mxu0 0.0
    %392 = vmatpush1.msra.mxu0 0.0
    %393 = vmatprep.subr.mxu0 0.0
    %394 = vmatpush1.msra.mxu0 0.0
    %395 = vmatprep.subr.mxu0 0.0
    %396 = vmatpush1.msra.mxu0 0.0
    %397 = vmatprep.mubr.f32.mxu0 0.0
    %398 = vmatmul.mubr.f32.gmra.mrb[0].mxu0 %v327
    %v399 = vpop.f32.mrb[0].mxu0
    %v400 = vadd.f32 %v324, %v399
    %v401 = vpop.f32.mrb[0].mxu0
    %402 = vdwg.mxu0
    %vm403 = vcmask 123904
    %404 = vst.msk [vmem:[#allocation4] sm:$0x3] %vm403, %v400
    %v405 = vlaneseq
    %v406 = vshrl.u32 %v405, 7
    %v407 = vsub.s32 0, %v406
    %v408 = vrot.slane %v28, %v407
    %v410 = vsel %vm32, %v400, 0
    %412 = vmatprep.subr.mxu0 0.0
    %413 = vmatpush1.msra.mxu0 %v26
    %414 = vmatprep.subr.mxu0 0.0
    %415 = vmatpush1.msra.mxu0 %v27
    %416 = vmatprep.subr.mxu0 0.0
    %417 = vmatpush1.msra.mxu0 0.0
    %418 = vmatprep.subr.mxu0 0.0
    %419 = vmatpush1.msra.mxu0 0.0
    %420 = vmatprep.subr.mxu0 0.0
    %421 = vmatpush1.msra.mxu0 0.0
    %422 = vmatprep.subr.mxu0 0.0
    %423 = vmatpush1.msra.mxu0 0.0
    %424 = vmatprep.subr.mxu0 0.0
    %425 = vmatpush1.msra.mxu0 0.0
    %426 = vmatprep.subr.mxu0 0.0
    %427 = vmatpush1.msra.mxu0 0.0
    %428 = vmatprep.subr.mxu0 0.0
    %429 = vmatpush1.msra.mxu0 0.0
    %430 = vmatprep.subr.mxu0 0.0
    %431 = vmatpush1.msra.mxu0 0.0
    %432 = vmatprep.subr.mxu0 0.0
    %433 = vmatpush1.msra.mxu0 0.0
    %434 = vmatprep.subr.mxu0 0.0
    %435 = vmatpush1.msra.mxu0 0.0
    %436 = vmatprep.subr.mxu0 0.0
    %437 = vmatpush1.msra.mxu0 0.0
    %438 = vmatprep.subr.mxu0 0.0
    %439 = vmatpush1.msra.mxu0 0.0
    %440 = vmatprep.subr.mxu0 0.0
    %441 = vmatpush1.msra.mxu0 0.0
    %442 = vmatprep.subr.mxu0 0.0
    %443 = vmatpush1.msra.mxu0 0.0
    %444 = vmatprep.subr.mxu0 0.0
    %445 = vmatpush1.msra.mxu0 0.0
    %446 = vmatprep.subr.mxu0 0.0
    %447 = vmatpush1.msra.mxu0 0.0
    %448 = vmatprep.subr.mxu0 0.0
    %449 = vmatpush1.msra.mxu0 0.0
    %450 = vmatprep.subr.mxu0 0.0
    %451 = vmatpush1.msra.mxu0 0.0
    %452 = vmatprep.subr.mxu0 0.0
    %453 = vmatpush1.msra.mxu0 0.0
    %454 = vmatprep.subr.mxu0 0.0
    %455 = vmatpush1.msra.mxu0 0.0
    %456 = vmatprep.subr.mxu0 0.0
    %457 = vmatpush1.msra.mxu0 0.0
    %458 = vmatprep.subr.mxu0 0.0
    %459 = vmatpush1.msra.mxu0 0.0
    %460 = vmatprep.subr.mxu0 0.0
    %461 = vmatpush1.msra.mxu0 0.0
    %462 = vmatprep.subr.mxu0 0.0
    %463 = vmatpush1.msra.mxu0 0.0
    %464 = vmatprep.subr.mxu0 0.0
    %465 = vmatpush1.msra.mxu0 0.0
    %466 = vmatprep.subr.mxu0 0.0
    %467 = vmatpush1.msra.mxu0 0.0
    %468 = vmatprep.subr.mxu0 0.0
    %469 = vmatpush1.msra.mxu0 0.0
    %470 = vmatprep.subr.mxu0 0.0
    %471 = vmatpush1.msra.mxu0 0.0
    %472 = vmatprep.subr.mxu0 0.0
    %473 = vmatpush1.msra.mxu0 0.0
    %474 = vmatprep.subr.mxu0 0.0
    %475 = vmatpush1.msra.mxu0 0.0
    %476 = vmatprep.mubr.f32.mxu0 0.0
    %477 = vmatmul.mubr.f32.gmra.mrb[0].mxu0 %v410
    %v478 = vpop.f32.mrb[0].mxu0
    %v479 = vadd.f32 %v408, %v478
    %v480 = vpop.f32.mrb[0].mxu0
    %481 = vdwg.mxu0
    %v482 = vmax.f32 %v479, 0.0
    %v483 = vlaneseq
    %v484 = vshrl.u32 %v483, 7
    %v485 = vsub.s32 0, %v484
    %v486 = vrot.slane %v31, %v485
    %v488 = vsel %vm32, %v482, 0
    %490 = vmatprep.subr.mxu0 0.0
    %491 = vmatpush1.msra.mxu0 %v29
    %492 = vmatprep.subr.mxu0 0.0
    %493 = vmatpush1.msra.mxu0 %v30
    %494 = vmatprep.subr.mxu0 0.0
    %495 = vmatpush1.msra.mxu0 0.0
    %496 = vmatprep.subr.mxu0 0.0
    %497 = vmatpush1.msra.mxu0 0.0
    %498 = vmatprep.subr.mxu0 0.0
    %499 = vmatpush1.msra.mxu0 0.0
    %500 = vmatprep.subr.mxu0 0.0
    %501 = vmatpush1.msra.mxu0 0.0
    %502 = vmatprep.subr.mxu0 0.0
    %503 = vmatpush1.msra.mxu0 0.0
    %504 = vmatprep.subr.mxu0 0.0
    %505 = vmatpush1.msra.mxu0 0.0
    %506 = vmatprep.subr.mxu0 0.0
    %507 = vmatpush1.msra.mxu0 0.0
    %508 = vmatprep.subr.mxu0 0.0
    %509 = vmatpush1.msra.mxu0 0.0
    %510 = vmatprep.subr.mxu0 0.0
    %511 = vmatpush1.msra.mxu0 0.0
    %512 = vmatprep.subr.mxu0 0.0
    %513 = vmatpush1.msra.mxu0 0.0
    %514 = vmatprep.subr.mxu0 0.0
    %515 = vmatpush1.msra.mxu0 0.0
    %516 = vmatprep.subr.mxu0 0.0
    %517 = vmatpush1.msra.mxu0 0.0
    %518 = vmatprep.subr.mxu0 0.0
    %519 = vmatpush1.msra.mxu0 0.0
    %520 = vmatprep.subr.mxu0 0.0
    %521 = vmatpush1.msra.mxu0 0.0
    %522 = vmatprep.subr.mxu0 0.0
    %523 = vmatpush1.msra.mxu0 0.0
    %524 = vmatprep.subr.mxu0 0.0
    %525 = vmatpush1.msra.mxu0 0.0
    %526 = vmatprep.subr.mxu0 0.0
    %527 = vmatpush1.msra.mxu0 0.0
    %528 = vmatprep.subr.mxu0 0.0
    %529 = vmatpush1.msra.mxu0 0.0
    %530 = vmatprep.subr.mxu0 0.0
    %531 = vmatpush1.msra.mxu0 0.0
    %532 = vmatprep.subr.mxu0 0.0
    %533 = vmatpush1.msra.mxu0 0.0
    %534 = vmatprep.subr.mxu0 0.0
    %535 = vmatpush1.msra.mxu0 0.0
    %536 = vmatprep.subr.mxu0 0.0
    %537 = vmatpush1.msra.mxu0 0.0
    %538 = vmatprep.subr.mxu0 0.0
    %539 = vmatpush1.msra.mxu0 0.0
    %540 = vmatprep.subr.mxu0 0.0
    %541 = vmatpush1.msra.mxu0 0.0
    %542 = vmatprep.subr.mxu0 0.0
    %543 = vmatpush1.msra.mxu0 0.0
    %544 = vmatprep.subr.mxu0 0.0
    %545 = vmatpush1.msra.mxu0 0.0
    %546 = vmatprep.subr.mxu0 0.0
    %547 = vmatpush1.msra.mxu0 0.0
    %548 = vmatprep.subr.mxu0 0.0
    %549 = vmatpush1.msra.mxu0 0.0
    %550 = vmatprep.subr.mxu0 0.0
    %551 = vmatpush1.msra.mxu0 0.0
    %552 = vmatprep.subr.mxu0 0.0
    %553 = vmatpush1.msra.mxu0 0.0
    %554 = vmatprep.mubr.f32.mxu0 0.0
    %555 = vmatmul.mubr.f32.gmra.mrb[0].mxu0 %v488
    %v556 = vpop.f32.mrb[0].mxu0
    %v557 = vadd.f32 %v486, %v556
    %v558 = vpop.f32.mrb[0].mxu0
    %559 = vdwg.mxu0
    %v560 = vxor.u32 %v557, 2147483648
    %v561 = vmul.f32 %v560, 1.442695
    %v562 = vpow.pop %v561
    %v563 = vadd.f32 %v562, 1.0
    %v564 = vrcp.pop %v563
    %v565 = vmul.f32 1.0, %v564
    %v566 = vmul.f32 %v565, 2.0
    %v567 = vadd.f32 %v566, 1.0
    %vm568 = vcmask 74752
    %569 = vst.msk [vmem:[#allocation6] sm:$0x3] %vm568, %v567
    // Predicated region
    $region6: #{tpu_custom_call.1} parent=1 // pred_check
      _
    $region7: #{tpu_custom_call.1} parent=1 // pred_check_branch
      %571 = sbr.rel (0) target = $region9
    $region8: #{tpu_custom_call.1} parent=1 // pred_region
      %s573 = ssub.s32 64, 64
      %574 = vsyncadd [#allocation3], %s573
      %s576 = sshll.u32 [#allocation2], 4
      %s577 = int_to_ptr.vmem [resolvable:$true] %s576
      %579 = dma.vmem_to_hbm [thread:$0]  %s577, 64, %s1, [#allocation3]
    $region9: #{tpu_custom_call.1} parent=1 // pred_fallthru
      _
    // Predicated region
    $region10: #{tpu_custom_call.1} parent=1 // pred_check
      _
    $region11: #{tpu_custom_call.1} parent=1 // pred_check_branch
      %581 = sbr.rel (0) target = $region13
    $region12: #{tpu_custom_call.1} parent=1 // pred_region
      _
    $region13: #{tpu_custom_call.1} parent=1 // pred_fallthru
      _
    // Predicated region
    $region14: #{tpu_custom_call.1} parent=1 // pred_check
      _
    $region15: #{tpu_custom_call.1} parent=1 // pred_check_branch
      %583 = sbr.rel (0) target = $region17
    $region16: #{tpu_custom_call.1} parent=1 // pred_region
      %s585 = ssub.s32 32, 32
      %586 = vsyncadd [#allocation5], %s585
      %s588 = sshll.u32 [#allocation4], 4
      %s589 = int_to_ptr.vmem [resolvable:$true] %s588
      %591 = dma.vmem_to_hbm [thread:$0]  %s589, 32, %s3, [#allocation5]
    $region17: #{tpu_custom_call.1} parent=1 // pred_fallthru
      _
    // Predicated region
    $region18: #{tpu_custom_call.1} parent=1 // pred_check
      _
    $region19: #{tpu_custom_call.1} parent=1 // pred_check_branch
      %593 = sbr.rel (0) target = $region21
    $region20: #{tpu_custom_call.1} parent=1 // pred_region
      %s595 = ssub.s32 32, 32
      %596 = vsyncadd [#allocation5], %s595
      %s598 = sshll.u32 [#allocation6], 4
      %s599 = int_to_ptr.vmem [resolvable:$true] %s598
      %601 = dma.vmem_to_hbm [thread:$0]  %s599, 32, %s4, [#allocation5]
    $region21: #{tpu_custom_call.1} parent=1 // pred_fallthru
      _
    // Predicated region
    $region22: #{tpu_custom_call.1} parent=1 // pred_check
      _
    $region23: #{tpu_custom_call.1} parent=1 // pred_check_branch
      %603 = sbr.rel (0) target = $region25
    $region24: #{tpu_custom_call.1} parent=1 // pred_region
      %604 = dma.done [#allocation3], 64
    $region25: #{tpu_custom_call.1} parent=1 // pred_fallthru
      _
    // Predicated region
    $region26: #{tpu_custom_call.1} parent=1 // pred_check
      _
    $region27: #{tpu_custom_call.1} parent=1 // pred_check_branch
      %606 = sbr.rel (0) target = $region29
    $region28: #{tpu_custom_call.1} parent=1 // pred_region
      _
    $region29: #{tpu_custom_call.1} parent=1 // pred_fallthru
      _
    // Predicated region
    $region30: #{tpu_custom_call.1} parent=1 // pred_check
      _
    $region31: #{tpu_custom_call.1} parent=1 // pred_check_branch
      %608 = sbr.rel (0) target = $region33
    $region32: #{tpu_custom_call.1} parent=1 // pred_region
      %609 = dma.done [#allocation5], 32
    $region33: #{tpu_custom_call.1} parent=1 // pred_fallthru
      _
    // Predicated region
    $region34: #{tpu_custom_call.1} parent=1 // pred_check
      _
    $region35: #{tpu_custom_call.1} parent=1 // pred_check_branch
      %611 = sbr.rel (0) target = $region37
    $region36: #{tpu_custom_call.1} parent=1 // pred_region
      %612 = dma.done [#allocation5], 32
    $region37: #{tpu_custom_call.1} parent=1 // pred_fallthru
      _
    %613 = vsyncpa [#allocation3], 1
    %614 = vsyncpa [#allocation5], 1

</llo_original>
